<compile_context>
chip_gen: v7x
topology: tpu7x:2x2x1
jax: 0.10.0
libtpu: 0.0.40
codegen_flags: <defaults>
</compile_context>

<pallas_src>
import functools

import jax
import jax.numpy as jnp
from jax import lax
from jax.experimental import pallas as pl
from jax.experimental.pallas import tpu as pltpu

LANES = 128
SUBLANES = 8
TILE_ROWS_MAX = 4096   # (4096,128) f32 = 2 MiB/input tile; amortizes grid-step overhead
CHUNK_ROWS = 512       # inner-loop chunk; bounds per-chunk VMEM temporaries


def _pick_chunk_rows(tile_rows):
    """Largest multiple-of-8 divisor of tile_rows that is <= CHUNK_ROWS."""
    if tile_rows % SUBLANES != 0:
        return tile_rows                      # small odd tile: single chunk
    d = min(CHUNK_ROWS, tile_rows)
    d -= d % SUBLANES
    while d > SUBLANES and tile_rows % d != 0:
        d -= SUBLANES
    return max(d, SUBLANES)


def _bce_partial_kernel(pred_ref, label_ref, out_ref, acc_ref, *,
                        tile_rows, chunk_rows, tiles_per_slice, rows_valid,
                        any_partial, hard_labels):
    """Accumulates per-slice sums of the (clamped) BCE log blend.

    The accumulated quantity is  t*log(p) + (1-t)*log(1-p)  (each log clamped
    at -100, so it is <= 0); the negation happens once at finalize.
    """
    c = pl.program_id(0)   # parallel slice axis (megacore)
    i = pl.program_id(1)   # sequential tiles within the slice

    @pl.when(i == 0)
    def _init():
        acc_ref[...] = jnp.zeros_like(acc_ref)

    g = c * tiles_per_slice + i        # unclamped global tile index
    row0 = g * tile_rows               # unclamped global row offset
    n_chunks = tile_rows // chunk_rows

    def log_terms(p, lbl):
        if hard_labels:
            # Exact only for {0,1} labels; label compared in native dtype.
            q = jnp.where(lbl != 0, p, 1.0 - p)
            return jnp.maximum(jnp.log(q), jnp.float32(-100.0))
        t = lbl.astype(jnp.float32)
        # Clamp BEFORE the blend (PyTorch semantics; avoids -inf * 0 = NaN).
        log_p = jnp.maximum(jnp.log(p), jnp.float32(-100.0))
        log_1mp = jnp.maximum(jnp.log(1.0 - p), jnp.float32(-100.0))
        return t * log_p + (1.0 - t) * log_1mp

    def accumulate(masked):
        row_limit = rows_valid - row0   # tile-local rows >= this are invalid

        def chunk_term(r0):
            p = pred_ref[pl.ds(r0, chunk_rows), :].astype(jnp.float32)
            lbl = label_ref[pl.ds(r0, chunk_rows), :]
            term = log_terms(p, lbl)
            if masked:
                rid = r0 + lax.broadcasted_iota(
                    jnp.int32, (chunk_rows, LANES), 0)
                # Invalid region may hold garbage (NaN after log); the select
                # discards it.
                term = jnp.where(rid < row_limit, term, jnp.float32(0.0))
            return term

        if chunk_rows % SUBLANES != 0:
            # Small tile whose row count is not 8-aligned: one chunk, reduce
            # rows into the accumulator's first sublane.
            acc_ref[0:1, :] += jnp.sum(chunk_term(0), axis=0, keepdims=True)
            return

        def reduce_chunk(term):
            # (chunk,128) -> (chunk/8,8,128) -> VPU-only adds into 8 vregs.
            return term.reshape(chunk_rows // SUBLANES, SUBLANES, LANES).sum(0)

        if n_chunks == 1:
            acc_ref[...] += reduce_chunk(chunk_term(0))
        else:
            def body(ci, acc):
                r0 = pl.multiple_of(ci * chunk_rows, chunk_rows)
                return acc + reduce_chunk(chunk_term(r0))
            acc_ref[...] += lax.fori_loop(
                0, n_chunks, body,
                jnp.zeros((SUBLANES, LANES), jnp.float32), unroll=True)

    if any_partial:
        is_full = (row0 + tile_rows) <= rows_valid

        @pl.when(is_full)
        def _full():
            accumulate(masked=False)

        @pl.when(row0 + tile_rows > rows_valid)
        def _partial():
            accumulate(masked=True)
    else:
        accumulate(masked=False)

    @pl.when(i == tiles_per_slice - 1)
    def _finalize():
        # Single cross-lane reduce per slice; negate once here.
        out_ref[0, 0] = -jnp.sum(acc_ref[...])


def _bce_sum_pallas(pred_2d, label_2d, hard_labels):
    """Sum of elementwise BCE over a (rows, 128) slab (f32 result)."""
    rows = pred_2d.shape[0]

    tile_rows = rows if rows <= TILE_ROWS_MAX else TILE_ROWS_MAX
    chunk_rows = _pick_chunk_rows(tile_rows)
    num_blocks = -(-rows // tile_rows)
    num_slices = 2 if num_blocks >= 2 else 1       # both TCs on v7x
    tiles_per_slice = -(-num_blocks // num_slices)
    any_partial = (num_slices * tiles_per_slice * tile_rows) != rows

    kernel = functools.partial(
        _bce_partial_kernel,
        tile_rows=tile_rows,
        chunk_rows=chunk_rows,
        tiles_per_slice=tiles_per_slice,
        rows_valid=rows,
        any_partial=any_partial,
        hard_labels=hard_labels,
    )

    def in_map(c, i):
        g = c * tiles_per_slice + i
        # Overhang tiles re-read the last real block; their contribution is
        # fully masked out in-kernel.
        return (jnp.minimum(g, num_blocks - 1), 0)

    partials = pl.pallas_call(
        kernel,
        out_shape=jax.ShapeDtypeStruct((num_slices, 1), jnp.float32),
        grid_spec=pltpu.PrefetchScalarGridSpec(
            num_scalar_prefetch=0,
            grid=(num_slices, tiles_per_slice),
            in_specs=[
                pl.BlockSpec((tile_rows, LANES), in_map),
                pl.BlockSpec((tile_rows, LANES), in_map),
            ],
            out_specs=pl.BlockSpec(
                (1, 1), lambda c, i: (c, 0), memory_space=pltpu.SMEM),
            scratch_shapes=[pltpu.VMEM((SUBLANES, LANES), jnp.float32)],
        ),
        compiler_params=pltpu.CompilerParams(
            dimension_semantics=("parallel", "arbitrary")),
    )(pred_2d, label_2d)

    return jnp.sum(partials)


@functools.partial(jax.jit, static_argnames=("hard_labels",))
def cls_loss_forward(pred_cls, label, hard_labels=False):
    """JAX/Pallas equivalent of CLS_Loss.forward (loss value only).

    hard_labels=True enables the single-log fast path (exact for {0,1}
    labels only); the default two-log path matches F.binary_cross_entropy
    for soft labels as well.
    """
    assert pred_cls.shape == label.shape, f"{pred_cls.shape} != {label.shape}"
    n = pred_cls.size

    pred_flat = pred_cls.reshape(-1)
    label_flat = label.reshape(-1)

    rows = n // LANES
    n_main = rows * LANES

    total = jnp.float32(0.0)

    if rows > 0:
        if n_main == n:
            # Divisible by 128: reshape is a free bitcast, zero extra HBM traffic.
            pred_2d = pred_flat.reshape(rows, LANES)
            label_2d = label_flat.reshape(rows, LANES)
        else:
            pred_2d = pred_flat[:n_main].reshape(rows, LANES)
            label_2d = label_flat[:n_main].reshape(rows, LANES)
        total = total + _bce_sum_pallas(pred_2d, label_2d, hard_labels)

    if n_main != n:
        # <128-element ragged tail: tiny pure-JAX reduction (no full padded
        # copies of the inputs).
        p_t = pred_flat[n_main:].astype(jnp.float32)
        l_t = label_flat[n_main:]
        if hard_labels:
            q = jnp.where(l_t != 0, p_t, 1.0 - p_t)
            tail = -jnp.sum(jnp.maximum(jnp.log(q), jnp.float32(-100.0)))
        else:
            t_t = l_t.astype(jnp.float32)
            tail = -jnp.sum(
                t_t * jnp.maximum(jnp.log(p_t), jnp.float32(-100.0))
                + (1.0 - t_t) * jnp.maximum(jnp.log(1.0 - p_t),
                                            jnp.float32(-100.0)))
        total = total + tail

    return total / jnp.float32(n)


class CLSLossPallas:
    """Mirrors CLS_Loss: returns (total_loss, loss_dict).

    By default loss_dict holds JAX scalars (no per-step device sync); set
    sync_metrics=True to reproduce PyTorch's .item() Python floats.
    """

    def __init__(self, hard_labels=False, sync_metrics=False):
        self.hard_labels = hard_labels
        self.sync_metrics = sync_metrics

    def __call__(self, pred_cls, label):
        cls_loss = cls_loss_forward(pred_cls, label,
                                    hard_labels=self.hard_labels)
        total_loss = cls_loss
        if self.sync_metrics:
            loss_dict = {"total_loss": float(total_loss),
                         "cls_bce_loss": float(cls_loss)}
        else:
            loss_dict = {"total_loss": total_loss, "cls_bce_loss": cls_loss}
        return total_loss, loss_dict


if __name__ == "__main__":
    key = jax.random.PRNGKey(0)
    k1, k2, k3, k4, k5, k6 = jax.random.split(key, 6)

    def ref_bce_mean(p, t):
        p = p.astype(jnp.float32)
        t = t.astype(jnp.float32)
        return jnp.mean(
            -(t * jnp.maximum(jnp.log(p), -100.0)
              + (1.0 - t) * jnp.maximum(jnp.log(1.0 - p), -100.0)))

    # --- primary example: small NCHW-like shape ---------------------------
    shape = (2, 4, 16, 16)
    pred_cls = jax.nn.sigmoid(jax.random.normal(k1, shape, jnp.float32))
    label = (jax.random.uniform(k2, shape) > 0.5).astype(jnp.float32)

    loss_fn = CLSLossPallas()
    total_loss, loss_dict = loss_fn(pred_cls, label)
    jax.block_until_ready(total_loss)
    ref = ref_bce_mean(pred_cls, label)
    assert abs(float(total_loss) - float(ref)) < 1e-5, (total_loss, ref)

    # Hard-label single-log fast path (exact for {0,1} labels).
    hard_loss, _ = CLSLossPallas(hard_labels=True)(pred_cls, label)
    assert abs(float(hard_loss) - float(ref)) < 1e-5, (hard_loss, ref)

    # --- ragged size (n % 128 != 0): kernel prefix + tiny JAX tail --------
    shape_r = (3, 5, 139)          # 2085 elements = 16*128 + 37
    pred_r = jax.nn.sigmoid(jax.random.normal(k3, shape_r, jnp.float32))
    label_r = (jax.random.uniform(k4, shape_r) > 0.5).astype(jnp.float32)
    loss_r, _ = loss_fn(pred_r, label_r)
    assert abs(float(loss_r) - float(ref_bce_mean(pred_r, label_r))) < 1e-5

    # --- multi-tile / partial-tile / two-slice path ------------------------
    shape_b = (2, 4, 320, 320)     # 819200 elements = 6400 rows of 128
    pred_b = jax.nn.sigmoid(jax.random.normal(k5, shape_b, jnp.float32))
    label_b = (jax.random.uniform(k6, shape_b) > 0.5).astype(jnp.float32)
    loss_b, _ = loss_fn(pred_b, label_b)
    assert abs(float(loss_b) - float(ref_bce_mean(pred_b, label_b))) < 2e-5

    print("KERNEL_OK")
</pallas_src>

<mosaic_0001>
module attributes {stable_mosaic.version = 11 : i64} {
  func.func @_bce_partial_kernel(%arg0: i32, %arg1: i32, %arg2: memref<16x128xf32, #tpu.memory_space<vmem>>, %arg3: memref<16x128xf32, #tpu.memory_space<vmem>>, %arg4: memref<1x1xf32, #tpu.memory_space<smem>>, %arg5: memref<8x128xf32, #tpu.memory_space<vmem>>) attributes {dimension_semantics = [#tpu.dimension_semantics<parallel>, #tpu.dimension_semantics<arbitrary>], iteration_bounds = array<i64: 1, 1>, scalar_prefetch = 0 : i64, scratch_operands = 1 : i64, tpu.core_type = #tpu.core_type<tc>, window_params = [{transform_indices = @transform_0, window_bounds = array<i64: 16, 128>}, {transform_indices = @transform_1, window_bounds = array<i64: 16, 128>}, {transform_indices = @transform_2, window_bounds = array<i64: 1, 1>}]} {
    %c0_i32 = arith.constant 0 : i32
    %0 = arith.cmpi eq, %arg1, %c0_i32 : i32
    %1 = arith.extui %0 : i1 to i32
    %c0_i32_0 = arith.constant 0 : i32
    %2 = arith.cmpi ne, %1, %c0_i32_0 : i32
    scf.if %2 {
      %cst_14 = arith.constant 0.000000e+00 : f32
      %26 = vector.broadcast %cst_14 : f32 to vector<8x128xf32>
      %c0_15 = arith.constant 0 : index
      %c0_16 = arith.constant 0 : index
      %27 = vector.load %arg5[%c0_15, %c0_16] : memref<8x128xf32, #tpu.memory_space<vmem>>, vector<8x128xf32>
      tpu.vector_store %arg5[%c0_15, %c0_16], %26 {strides = array<i32>} : memref<8x128xf32, #tpu.memory_space<vmem>>, vector<8x128xf32>,
    } else {
    }
    %c0 = arith.constant 0 : index
    %c0_1 = arith.constant 0 : index
    %3 = vector.load %arg5[%c0, %c0_1] : memref<8x128xf32, #tpu.memory_space<vmem>>, vector<8x128xf32>
    %c0_2 = arith.constant 0 : index
    %c0_3 = arith.constant 0 : index
    %4 = vector.load %arg2[%c0_2, %c0_3] : memref<16x128xf32, #tpu.memory_space<vmem>>, vector<16x128xf32>
    %c0_4 = arith.constant 0 : index
    %c0_5 = arith.constant 0 : index
    %5 = vector.load %arg3[%c0_4, %c0_5] : memref<16x128xf32, #tpu.memory_space<vmem>>, vector<16x128xf32>
    %6 = math.log %4 : vector<16x128xf32>
    %cst = arith.constant -1.000000e+02 : f32
    %7 = vector.broadcast %cst : f32 to vector<16x128xf32>
    %8 = arith.maximumf %6, %7 : vector<16x128xf32>
    %cst_6 = arith.constant 1.000000e+00 : f32
    %9 = vector.broadcast %cst_6 : f32 to vector<16x128xf32>
    %10 = arith.subf %9, %4 : vector<16x128xf32>
    %11 = math.log %10 : vector<16x128xf32>
    %cst_7 = arith.constant -1.000000e+02 : f32
    %12 = vector.broadcast %cst_7 : f32 to vector<16x128xf32>
    %13 = arith.maximumf %11, %12 : vector<16x128xf32>
    %14 = arith.mulf %5, %8 : vector<16x128xf32>
    %cst_8 = arith.constant 1.000000e+00 : f32
    %15 = vector.broadcast %cst_8 : f32 to vector<16x128xf32>
    %16 = arith.subf %15, %5 : vector<16x128xf32>
    %17 = arith.mulf %16, %13 : vector<16x128xf32>
    %18 = arith.addf %14, %17 : vector<16x128xf32>
    %19 = vector.shape_cast %18 : vector<16x128xf32> to vector<2x8x128xf32>
    %cst_9 = arith.constant dense<0.000000e+00> : vector<8x128xf32>
    %20 = vector.multi_reduction <add>, %19, %cst_9 [0] : vector<2x8x128xf32> to vector<8x128xf32>
    %21 = arith.addf %3, %20 : vector<8x128xf32>
    %c0_10 = arith.constant 0 : index
    %c0_11 = arith.constant 0 : index
    %22 = vector.load %arg5[%c0_10, %c0_11] : memref<8x128xf32, #tpu.memory_space<vmem>>, vector<8x128xf32>
    tpu.vector_store %arg5[%c0_10, %c0_11], %21 {strides = array<i32>} : memref<8x128xf32, #tpu.memory_space<vmem>>, vector<8x128xf32>,
    %c0_i32_12 = arith.constant 0 : i32
    %23 = arith.cmpi eq, %arg1, %c0_i32_12 : i32
    %24 = arith.extui %23 : i1 to i32
    %c0_i32_13 = arith.constant 0 : i32
    %25 = arith.cmpi ne, %24, %c0_i32_13 : i32
    scf.if %25 {
      %c0_14 = arith.constant 0 : index
      %c0_15 = arith.constant 0 : index
      %26 = vector.load %arg5[%c0_14, %c0_15] : memref<8x128xf32, #tpu.memory_space<vmem>>, vector<8x128xf32>
      %27 = vector.shape_cast %26 : vector<8x128xf32> to vector<1x8x128xf32>
      %cst_16 = arith.constant dense<0.000000e+00> : vector<1xf32>
      %28 = vector.multi_reduction <add>, %27, %cst_16 [1, 2] : vector<1x8x128xf32> to vector<1xf32>
      %29 = vector.shape_cast %28 : vector<1xf32> to vector<1x1x1xf32>
      %30 = vector.extract %29[0, 0, 0] : f32 from vector<1x1x1xf32>
      %cst_17 = arith.constant 0.000000e+00 : f32
      %31 = arith.subf %cst_17, %30 : f32
      %c0_18 = arith.constant 0 : index
      %c0_19 = arith.constant 0 : index
      %32 = memref.load %arg4[%c0_18, %c0_19] : memref<1x1xf32, #tpu.memory_space<smem>>
      memref.store %31, %arg4[%c0_18, %c0_19] : memref<1x1xf32, #tpu.memory_space<smem>>
    } else {
    }
    return
  }
  func.func @transform_0(%arg0: i32, %arg1: i32) -> (i32, i32) {
    %c1_i32 = arith.constant 1 : i32
    %0 = arith.muli %arg0, %c1_i32 : i32
    %1 = arith.addi %0, %arg1 : i32
    %c0_i32 = arith.constant 0 : i32
    %2 = arith.minsi %1, %c0_i32 : i32
    %c0_i32_0 = arith.constant 0 : i32
    %c0_i32_1 = arith.constant 0 : i32
    return %2, %c0_i32_0 : i32, i32
  }
  func.func @transform_1(%arg0: i32, %arg1: i32) -> (i32, i32) {
    %c1_i32 = arith.constant 1 : i32
    %0 = arith.muli %arg0, %c1_i32 : i32
    %1 = arith.addi %0, %arg1 : i32
    %c0_i32 = arith.constant 0 : i32
    %2 = arith.minsi %1, %c0_i32 : i32
    %c0_i32_0 = arith.constant 0 : i32
    %c0_i32_1 = arith.constant 0 : i32
    return %2, %c0_i32_0 : i32, i32
  }
  func.func @transform_2(%arg0: i32, %arg1: i32) -> (i32, i32) {
    %c0_i32 = arith.constant 0 : i32
    %c0_i32_0 = arith.constant 0 : i32
    return %arg0, %c0_i32 : i32, i32
  }
}

</mosaic_0001>

<llo_original>
// kernel: cls_loss_forward.1
$region0: #{cls_loss_forward.1}
  #allocation0 [shape = 'u32[]', space=smem, size = 0x4, offset = 0x4, fixed_abs, tag = 'smem constant byte address 0x4 - core index']
  #allocation1 [shape = 'u32[144,128]{1,0:T(1,128)}', space=vmem, size = 0x12000, scoped, tag = 'internal scratch']
  #allocation2 [shape = 'f32[8,128]{1,0:T(8,128)}', space=vmem, size = 0x1000, scoped, tag = 'scratch operand']
  %s0 = inlined_call_operand.vmem [shape: f32[16,128], index: 0, kind: input, shape index: {}]
  %s1 = inlined_call_operand.vmem [shape: f32[16,128], index: 1, kind: input, shape index: {}]
  %s2 = inlined_call_operand.hbm [shape: f32[1,1], index: 2, kind: output, shape index: {}]
  %s3 = sld [smem:[#allocation0]]
  $region26: #{cls_loss_forward.1} parent=0
    _
  %s5 = ssub.s32 1, %s3
  %s6 = scalar_select 0, %s5, %s3
  $region1: #{cls_loss_forward.1} parent=0
    #allocation3 [shape = 'u8[512]{0}', space=smem, size = 0x200, scoped, tag = 'output window, operand 0, single buffered']
    #allocation4 [shape = 's32[1]{0}', space=sflag, size = 0x4, scoped, tag = 'scoped memory for cls_loss_forward.1']
    %7 = vsyncpa [#allocation4], 0
    // Predicated region
    $region2: #{cls_loss_forward.1} parent=1 // pred_check
      _
    $region3: #{cls_loss_forward.1} parent=1 // pred_check_branch
      %9 = sbr.rel (0) target = $region5
    $region4: #{cls_loss_forward.1} parent=1 // pred_region
      %s10 = sadd.s32 0, 0
      %p11 = scmp.lt.s32.totalorder %s10, 0
      %s12 = scalar_select %p11, %s10, 0
      %s13 = smul.u32 2, %s12
      %p14 = scmp.lt.s32.totalorder %s13, 1
      %s15 = scalar_select %p14, %s13, 1
      %s16 = smul.addr %s15, 8
      %s17 = scalar_lea.vmem %s0, %s16
      %s18 = sadd.s32 0, 0
      %p19 = scmp.lt.s32.totalorder %s18, 0
      %s20 = scalar_select %p19, %s18, 0
      %s21 = smul.u32 2, %s20
    $region5: #{cls_loss_forward.1} parent=1 // pred_fallthru
      _
    // Predicated region
    $region6: #{cls_loss_forward.1} parent=1 // pred_check
      _
    $region7: #{cls_loss_forward.1} parent=1 // pred_check_branch
      %23 = sbr.rel (0) target = $region9
    $region8: #{cls_loss_forward.1} parent=1 // pred_region
      %s24 = sadd.s32 0, 0
      %p25 = scmp.lt.s32.totalorder %s24, 0
      %s26 = scalar_select %p25, %s24, 0
      %s27 = smul.u32 2, %s26
      %p28 = scmp.lt.s32.totalorder %s27, 1
      %s29 = scalar_select %p28, %s27, 1
      %s30 = smul.addr %s29, 8
      %s31 = scalar_lea.vmem %s1, %s30
      %s32 = sadd.s32 0, 0
      %p33 = scmp.lt.s32.totalorder %s32, 0
      %s34 = scalar_select %p33, %s32, 0
      %s35 = smul.u32 2, %s34
    $region9: #{cls_loss_forward.1} parent=1 // pred_fallthru
      _
    %s36 = sadd.s32 0, 0
    %p37 = scmp.lt.s32.totalorder %s36, 0
    %s38 = scalar_select %p37, %s36, 0
    %s39 = smul.u32 2, %s38
    %p40 = scmp.lt.s32.totalorder %s39, 1
    %s41 = scalar_select %p40, %s39, 1
    %s42 = smul.addr %s41, 8
    %s43 = scalar_lea.vmem %s0, %s42
    %s44 = sadd.s32 0, 0
    %p45 = scmp.lt.s32.totalorder %s44, 0
    %s46 = scalar_select %p45, %s44, 0
    %s47 = smul.u32 2, %s46
    %p48 = scmp.lt.s32.totalorder %s47, 1
    %s49 = scalar_select %p48, %s47, 1
    %s50 = smul.addr %s49, 8
    %s51 = scalar_lea.vmem %s1, %s50
    %s52 = sadd.s32 0, 0
    %p53 = scmp.lt.s32.totalorder %s52, 0
    %s54 = scalar_select %p53, %s52, 0
    %s55 = smul.u32 2, %s54
    %p56 = scmp.lt.s32.totalorder %s55, 1
    %s57 = scalar_select %p56, %s55, 1
    %s58 = smul.addr %s57, 8
    %s59 = scalar_lea.vmem %s0, %s58
    %s60 = sadd.s32 0, 0
    %p61 = scmp.lt.s32.totalorder %s60, 0
    %s62 = scalar_select %p61, %s60, 0
    %s63 = smul.u32 2, %s62
    %s64 = sadd.s32 0, 0
    %p65 = scmp.lt.s32.totalorder %s64, 0
    %s66 = scalar_select %p65, %s64, 0
    %s67 = smul.u32 2, %s66
    %p68 = scmp.lt.s32.totalorder %s67, 1
    %s69 = scalar_select %p68, %s67, 1
    %s70 = smul.addr %s69, 8
    %s71 = scalar_lea.vmem %s1, %s70
    %s72 = sadd.s32 0, 0
    %p73 = scmp.lt.s32.totalorder %s72, 0
    %s74 = scalar_select %p73, %s72, 0
    %s75 = smul.u32 2, %s74
    %p76 = scmp.eq.s32.totalorder 0, 0
    // Predicated region
    $region10: #{cls_loss_forward.1} parent=1 // pred_check
      %p77 = pneg %p76
    $region11: #{cls_loss_forward.1} parent=1 // pred_check_branch
      %79 = sbr.rel (%p77) target = $region13
    $region12: #{cls_loss_forward.1} parent=1 // pred_region
      %80 = vst [vmem:[#allocation2] sm:$0xff] 0.0
    $region13: #{cls_loss_forward.1} parent=1 // pred_fallthru
      _
    %v81 = vld [vmem:[#allocation2] sm:$0xff]
    %v82 = vld [vmem:[%s59] sm:$0xff]
    %v83 = vld [vmem:[%s59 + $0x8] sm:$0xff]
    %v84 = vld [vmem:[%s71] sm:$0xff]
    %v85 = vld [vmem:[%s71 + $0x8] sm:$0xff]
    %v86 = vlog2.pop %v82
    %v87 = vmul.f32 %v86, 0.6931472
    %v88 = vlog2.pop %v83
    %v89 = vmul.f32 %v88, 0.6931472
    %v90 = vmax.f32 %v87, -100.0
    %v91 = vmax.f32 %v89, -100.0
    %v92 = vsub.f32 1.0, %v82
    %v93 = vsub.f32 1.0, %v83
    %v94 = vlog2.pop %v92
    %v95 = vmul.f32 %v94, 0.6931472
    %v96 = vlog2.pop %v93
    %v97 = vmul.f32 %v96, 0.6931472
    %v98 = vmax.f32 %v95, -100.0
    %v99 = vmax.f32 %v97, -100.0
    %v100 = vmul.f32 %v84, %v90
    %v101 = vmul.f32 %v85, %v91
    %v102 = vsub.f32 1.0, %v84
    %v103 = vsub.f32 1.0, %v85
    %v104 = vmul.f32 %v102, %v98
    %v105 = vmul.f32 %v103, %v99
    %v106 = vadd.f32 %v100, %v104
    %v107 = vadd.f32 %v101, %v105
    %v108 = vadd.f32 %v106, %v107
    %v109 = vadd.f32 %v81, %v108
    %110 = vst [vmem:[#allocation2] sm:$0xff] %v109
    // Predicated region
    $region14: #{cls_loss_forward.1} parent=1 // pred_check
      %p111 = pneg %p76
    $region15: #{cls_loss_forward.1} parent=1 // pred_check_branch
      %113 = sbr.rel (%p111) target = $region17
    $region16: #{cls_loss_forward.1} parent=1 // pred_region
      %v114 = vld [vmem:[#allocation2] sm:$0xff]
      %115 = vadd.xlane.f32.xlu0 %v114
      %v116 = vpop.xlane.xlu0 %115
      %v117 = vrot.slane %v116, 4
      %v118 = vadd.f32 %v116, %v117
      %v119 = vrot.slane %v118, 2
      %v120 = vadd.f32 %v118, %v119
      %v121 = vrot.slane %v120, 1
      %v122 = vadd.f32 %v120, %v121
      %s123 = vtos %v122
      %s124 = ssub.f32 0.0, %s123
      %s125 = scalar_lea.smem [#allocation3], 0
      %126 = sst [smem:[%s125]] %s124
    $region17: #{cls_loss_forward.1} parent=1 // pred_fallthru
      _
    // Predicated region
    $region18: #{cls_loss_forward.1} parent=1 // pred_check
      _
    $region19: #{cls_loss_forward.1} parent=1 // pred_check_branch
      %128 = sbr.rel (0) target = $region21
    $region20: #{cls_loss_forward.1} parent=1 // pred_region
      %s130 = ssub.s32 16, 16
      %131 = vsyncadd [#allocation4], %s130
      %134 = dma.smem_to_hbm [#allocation3], 16, %s2, [#allocation4]
    $region21: #{cls_loss_forward.1} parent=1 // pred_fallthru
      _
    // Predicated region
    $region22: #{cls_loss_forward.1} parent=1 // pred_check
      _
    $region23: #{cls_loss_forward.1} parent=1 // pred_check_branch
      %136 = sbr.rel (0) target = $region25
    $region24: #{cls_loss_forward.1} parent=1 // pred_region
      %137 = dma.done [#allocation4], 16
    $region25: #{cls_loss_forward.1} parent=1 // pred_fallthru
      _
    %138 = sfence
    %139 = vsyncpa [#allocation4], 1

</llo_original>
